<compile_context>
chip_gen: v5e
topology: v5e:2x2
jax: 0.10.0
libtpu: 0.0.40
codegen_flags: <defaults>
</compile_context>

<pallas_src>
import functools

import jax
import jax.numpy as jnp
from jax.experimental import pallas as pl
from jax.experimental.pallas import tpu as pltpu


def _speaker_embed_kernel(x_ref, w_ref, b_ref, o_ref, acc_ref, *, inv_t):
    """Tiled temporal pooling + single projection matmul.

    Grid: (batch blocks ["parallel"], time blocks ["arbitrary" reduction]).

    x_ref:   (TB, TT, D) bf16  current batch/time tile
    w_ref:   (D, H)      bf16  projection weights (resident block)
    b_ref:   (1, H)      f32   bias (resident block)
    o_ref:   (TB, H)     f32   output embedding block (resident across T)
    acc_ref: (TB, D)     f32   scratch: running sum of frames over T
    """
    t = pl.program_id(1)

    @pl.when(t == 0)
    def _():
        acc_ref[...] = jnp.zeros_like(acc_ref)

    # VPU reduction of this time tile, accumulated in f32.  The bf16 x stream
    # is the only large HBM traffic in the kernel.
    acc_ref[...] += jnp.sum(x_ref[...].astype(jnp.float32), axis=1)

    @pl.when(t == pl.num_programs(1) - 1)
    def _():
        # mean(x) @ W == mean(x @ W): exact for the linear inner model, so the
        # (B, T, H) intermediate and T-fold extra MXU FLOPs are eliminated.
        mean_bd = acc_ref[...] * inv_t                       # (TB, D) f32
        emb = jnp.dot(
            mean_bd,
            w_ref[...].astype(jnp.float32),                  # tiny one-time cast
            preferred_element_type=jnp.float32,
        )                                                    # (TB, H) f32
        o_ref[...] = (emb + b_ref[...]).astype(o_ref.dtype)


def speaker_embed_pallas(x, w, b, *, t_tile=16):
    """Fused inner-model forward: mean-pool over T, project, add bias.

    x: (B, T, D) bf16   B % 8 == 0, D % 128 == 0, T % t_tile == 0
    w: (D, H)    bf16   H % 128 == 0
    b: (1, H)    f32
    returns (B, H) f32
    """
    B, T, D = x.shape
    H = w.shape[1]
    assert T % t_tile == 0, "T must be a multiple of the T tile (else mask)"
    assert B % 8 == 0 and D % 128 == 0 and H % 128 == 0, "use (8,128)-aligned dims"

    tb = B  # small batch: one batch block; axis still exists and is 'parallel'

    kernel = functools.partial(_speaker_embed_kernel, inv_t=1.0 / T)

    return pl.pallas_call(
        kernel,
        out_shape=jax.ShapeDtypeStruct((B, H), jnp.float32),
        grid_spec=pltpu.PrefetchScalarGridSpec(
            num_scalar_prefetch=0,
            grid=(B // tb, T // t_tile),
            in_specs=[
                pl.BlockSpec((tb, t_tile, D), lambda bi, ti: (bi, ti, 0)),
                pl.BlockSpec((D, H), lambda bi, ti: (0, 0)),
                pl.BlockSpec((1, H), lambda bi, ti: (0, 0)),
            ],
            out_specs=pl.BlockSpec((tb, H), lambda bi, ti: (bi, 0)),
            scratch_shapes=[pltpu.VMEM((tb, D), jnp.float32)],
        ),
        compiler_params=pltpu.CompilerParams(
            dimension_semantics=("parallel", "arbitrary"),
        ),
    )(x, w, b)


class WrappedModel:
    """JAX/Pallas analogue of SpeakerNet.WrappedModel: pure pass-through."""

    def __init__(self, module):
        self.module = module

    def __call__(self, x, label=None):
        return self.module(x, label)


class SyntheticSpeakerModel:
    """Deterministic synthetic inner model (linear projection + mean pooling)."""

    def __init__(self, feat_dim, embed_dim, key):
        k_w, k_b = jax.random.split(key)
        self.w = (
            jax.random.normal(k_w, (feat_dim, embed_dim), jnp.float32) * 0.05
        ).astype(jnp.bfloat16)
        self.b = jax.random.normal(k_b, (1, embed_dim), jnp.float32) * 0.01

    def __call__(self, x, label=None):
        emb = speaker_embed_pallas(x, self.w, self.b)
        # TODO(synk): when `label` is given the real SpeakerNet inner module
        # routes embeddings through a loss head; unspecified by WrappedModel.
        return emb


if __name__ == "__main__":
    key = jax.random.PRNGKey(0)
    k_model, k_x = jax.random.split(key)

    # Small but lane/sublane-aligned shapes: B mult of 8, D/H mult of 128.
    B, T, D, H = 8, 64, 128, 128
    inner = SyntheticSpeakerModel(feat_dim=D, embed_dim=H, key=k_model)
    model = WrappedModel(inner)

    x = jax.random.normal(k_x, (B, T, D), jnp.float32).astype(jnp.bfloat16)

    out = model(x, label=None)
    out = jax.block_until_ready(out)

    # Plain-JAX reference with identical math (f32 accumulation of bf16 inputs).
    ref = (
        jnp.mean(x.astype(jnp.float32), axis=1)
        @ inner.w.astype(jnp.float32)
    ) + inner.b

    assert out.shape == (B, H)
    assert jnp.allclose(out, ref, atol=1e-3, rtol=1e-3)

    print("KERNEL_OK")
</pallas_src>

<mosaic_0001>
module attributes {stable_mosaic.version = 11 : i64} {
  func.func @_speaker_embed_kernel(%arg0: i32, %arg1: i32, %arg2: memref<8x16x128xbf16, #tpu.memory_space<vmem>>, %arg3: memref<128x128xbf16, #tpu.memory_space<vmem>>, %arg4: memref<1x128xf32, #tpu.memory_space<vmem>>, %arg5: memref<8x128xf32, #tpu.memory_space<vmem>>, %arg6: memref<8x128xf32, #tpu.memory_space<vmem>>) attributes {dimension_semantics = [#tpu.dimension_semantics<parallel>, #tpu.dimension_semantics<arbitrary>], iteration_bounds = array<i64: 1, 4>, scalar_prefetch = 0 : i64, scratch_operands = 1 : i64, tpu.core_type = #tpu.core_type<tc>, window_params = [{transform_indices = @transform_0, window_bounds = array<i64: 8, 16, 128>}, {pipeline_mode = #tpu.pipeline_mode<synchronous>, transform_indices = @transform_1, window_bounds = array<i64: 128, 128>}, {pipeline_mode = #tpu.pipeline_mode<synchronous>, transform_indices = @transform_2, window_bounds = array<i64: 1, 128>}, {transform_indices = @transform_3, window_bounds = array<i64: 8, 128>}]} {
    %c0_i32 = arith.constant 0 : i32
    %0 = arith.cmpi eq, %arg1, %c0_i32 : i32
    %1 = arith.extui %0 : i1 to i32
    %c0_i32_0 = arith.constant 0 : i32
    %2 = arith.cmpi ne, %1, %c0_i32_0 : i32
    scf.if %2 {
      %cst_8 = arith.constant 0.000000e+00 : f32
      %12 = vector.broadcast %cst_8 : f32 to vector<8x128xf32>
      %c0_9 = arith.constant 0 : index
      %c0_10 = arith.constant 0 : index
      %13 = vector.load %arg6[%c0_9, %c0_10] : memref<8x128xf32, #tpu.memory_space<vmem>>, vector<8x128xf32>
      tpu.vector_store %arg6[%c0_9, %c0_10], %12 {strides = array<i32>} : memref<8x128xf32, #tpu.memory_space<vmem>>, vector<8x128xf32>,
    } else {
    }
    %c0 = arith.constant 0 : index
    %c0_1 = arith.constant 0 : index
    %3 = vector.load %arg6[%c0, %c0_1] : memref<8x128xf32, #tpu.memory_space<vmem>>, vector<8x128xf32>
    %c0_2 = arith.constant 0 : index
    %c0_3 = arith.constant 0 : index
    %c0_4 = arith.constant 0 : index
    %4 = vector.load %arg2[%c0_2, %c0_3, %c0_4] : memref<8x16x128xbf16, #tpu.memory_space<vmem>>, vector<8x16x128xbf16>
    %5 = arith.extf %4 : vector<8x16x128xbf16> to vector<8x16x128xf32>
    %cst = arith.constant dense<0.000000e+00> : vector<8x128xf32>
    %6 = vector.multi_reduction <add>, %5, %cst [1] : vector<8x16x128xf32> to vector<8x128xf32>
    %7 = arith.addf %3, %6 : vector<8x128xf32>
    %c0_5 = arith.constant 0 : index
    %c0_6 = arith.constant 0 : index
    %8 = vector.load %arg6[%c0_5, %c0_6] : memref<8x128xf32, #tpu.memory_space<vmem>>, vector<8x128xf32>
    tpu.vector_store %arg6[%c0_5, %c0_6], %7 {strides = array<i32>} : memref<8x128xf32, #tpu.memory_space<vmem>>, vector<8x128xf32>,
    %c3_i32 = arith.constant 3 : i32
    %9 = arith.cmpi eq, %arg1, %c3_i32 : i32
    %10 = arith.extui %9 : i1 to i32
    %c0_i32_7 = arith.constant 0 : i32
    %11 = arith.cmpi ne, %10, %c0_i32_7 : i32
    scf.if %11 {
      %c0_8 = arith.constant 0 : index
      %c0_9 = arith.constant 0 : index
      %12 = vector.load %arg6[%c0_8, %c0_9] : memref<8x128xf32, #tpu.memory_space<vmem>>, vector<8x128xf32>
      %cst_10 = arith.constant 1.562500e-02 : f32
      %13 = vector.broadcast %cst_10 : f32 to vector<8x128xf32>
      %14 = arith.mulf %12, %13 : vector<8x128xf32>
      %c0_11 = arith.constant 0 : index
      %c0_12 = arith.constant 0 : index
      %15 = vector.load %arg3[%c0_11, %c0_12] : memref<128x128xbf16, #tpu.memory_space<vmem>>, vector<128x128xbf16>
      %16 = arith.extf %15 : vector<128x128xbf16> to vector<128x128xf32>
      %cst_13 = arith.constant dense<0.000000e+00> : vector<8x128xf32>
      %17 = tpu.matmul %14, %16, %cst_13 {dimension_numbers = #tpu.dot_dimension_numbers<[1], [0], [0], [1], [0, 0, 1, 1], [], []>} : vector<8x128xf32>, vector<128x128xf32>, vector<8x128xf32> -> vector<8x128xf32>
      %c0_14 = arith.constant 0 : index
      %c0_15 = arith.constant 0 : index
      %18 = vector.load %arg4[%c0_14, %c0_15] : memref<1x128xf32, #tpu.memory_space<vmem>>, vector<1x128xf32>
      %19 = vector.broadcast %18 : vector<1x128xf32> to vector<8x128xf32>
      %20 = arith.addf %17, %19 : vector<8x128xf32>
      %c0_16 = arith.constant 0 : index
      %c0_17 = arith.constant 0 : index
      %21 = vector.load %arg5[%c0_16, %c0_17] : memref<8x128xf32, #tpu.memory_space<vmem>>, vector<8x128xf32>
      tpu.vector_store %arg5[%c0_16, %c0_17], %20 {strides = array<i32>} : memref<8x128xf32, #tpu.memory_space<vmem>>, vector<8x128xf32>,
    } else {
    }
    return
  }
  func.func @transform_0(%arg0: i32, %arg1: i32) -> (i32, i32, i32) {
    %c0_i32 = arith.constant 0 : i32
    %c0_i32_0 = arith.constant 0 : i32
    return %arg0, %arg1, %c0_i32 : i32, i32, i32
  }
  func.func @transform_1(%arg0: i32, %arg1: i32) -> (i32, i32) {
    %c0_i32 = arith.constant 0 : i32
    %c0_i32_0 = arith.constant 0 : i32
    %c0_i32_1 = arith.constant 0 : i32
    return %c0_i32, %c0_i32_0 : i32, i32
  }
  func.func @transform_2(%arg0: i32, %arg1: i32) -> (i32, i32) {
    %c0_i32 = arith.constant 0 : i32
    %c0_i32_0 = arith.constant 0 : i32
    %c0_i32_1 = arith.constant 0 : i32
    return %c0_i32, %c0_i32_0 : i32, i32
  }
  func.func @transform_3(%arg0: i32, %arg1: i32) -> (i32, i32) {
    %c0_i32 = arith.constant 0 : i32
    %c0_i32_0 = arith.constant 0 : i32
    return %arg0, %c0_i32 : i32, i32
  }
}

</mosaic_0001>

<llo_original>
// kernel: tpu_custom_call.1
$region0: #{tpu_custom_call.1}
  #allocation0 [shape = 'u32[]', space=smem, size = 0x4, offset = 0x4, fixed_abs, tag = 'smem constant byte address 0x4 - core index']
  #allocation1 [shape = 'u32[72,128]{1,0:T(1,128)}', space=vmem, size = 0x9000, scoped, tag = 'internal scratch']
  #allocation2 [shape = 'f32[8,128]{1,0:T(8,128)}', space=vmem, size = 0x1000, scoped, tag = 'scratch operand']
  #allocation9 [shape = 's32[]', space=sflag, size = 0x4, offset = 0, fixed_abs, tag = 'sflag constant byte address 0x0 - dummy sync flag']
  %s0 = inlined_call_operand.hbm [shape: bf16[8,64,128], index: 0, kind: input, shape index: {}]
  %s1 = inlined_call_operand.hbm [shape: bf16[128,128], index: 1, kind: input, shape index: {}]
  %s2 = inlined_call_operand.vmem [shape: f32[1,128], index: 2, kind: input, shape index: {}]
  %s3 = inlined_call_operand.hbm [shape: f32[8,128], index: 3, kind: output, shape index: {}]
  %s4 = sld [smem:[#allocation0]]
  $region61: #{tpu_custom_call.1} parent=0
    _
  %s6 = ssub.s32 1, %s4
  %s7 = scalar_select 0, %s6, %s4
  $region1: #{tpu_custom_call.1} parent=0
    #allocation3 [shape = 'u8[65536]{0}', space=vmem, size = 0x10000, scoped, tag = 'input window, operand 0']
    #allocation4 [shape = 's32[2]{0}', space=sflag, size = 0x8, scoped, tag = 'scoped memory for tpu_custom_call.1']
    #allocation5 [shape = 's32[2]{0}', space=sflag, size = 0x8, scoped, tag = 'scoped memory for tpu_custom_call.1']
    #allocation6 [shape = 'u8[32768]{0}', space=vmem, size = 0x8000, scoped, tag = 'input window, operand 1, single buffered']
    #allocation7 [shape = 's32[1]{0}', space=sflag, size = 0x4, scoped, tag = 'scoped memory for tpu_custom_call.1']
    #allocation8 [shape = 'u8[4096]{0}', space=vmem, size = 0x1000, scoped, tag = 'output window, operand 0, single buffered']
    %8 = vsyncpa [#allocation4], 0
    %s9 = scalar_lea.sflag [#allocation4], 1
    %10 = vsyncpa %s9, 0
    %11 = vsyncpa [#allocation7], 0
    %12 = vsyncpa [#allocation5], 0
    loop: start=0, step=1, limit=6
    $region2: #{tpu_custom_call.1} parent=1 // loop_pre_header
      _
    $region3: #{tpu_custom_call.1} parent=1 // loop_header
      %s14 = sphi 0, %s18
      %p15 = scmp.ge.s32.totalorder %s14, 6
      %s21 = sphi 0, %s33
      %s22 = sphi 0, %s29
      %s23 = sphi 0, %s21
      %s24 = sphi 0, %s22
      %s25 = sphi 0, %s23
      %s26 = sphi 0, %s24
      %s38 = sphi 0, %s40
      %s41 = sphi 0, %s38
      %s42 = sphi 0, %s41
      %s58 = sphi 0, %s42
      %s62 = sphi 0, %s62
      %s64 = sphi 0, %s62
      %s65 = sphi 0, %s64
      %s79 = sphi 0, %s65
      %s83 = sphi 0, %s83
      %s85 = sphi 0, %s83
      %s86 = sphi 0, %s85
      %s100 = sphi 0, %s86
      %s106 = sphi 0, %s108
      %s109 = sphi 0, %s106
      %s110 = sphi 0, %s109
      %s126 = sphi 0, %s110
    $region4: #{tpu_custom_call.1} parent=1 // loop_header_branch
      %17 = sbr.rel (%p15) target = $region8
    $region5: #{tpu_custom_call.1} parent=1 // loop_body
      %s19 = ssub.s32 %s14, 1
      %s20 = ssub.s32 %s14, 2
      %s27 = sadd.s32 1, %s22
      %p28 = scmp.ge.s32.totalorder %s27, 4
      %s29 = scalar_select %p28, 0, %s27
      %s30 = sadd.s32 1, %s21
      %s31 = scalar_select %p28, %s30, %s21
      %p32 = scmp.ge.s32.totalorder %s31, 1
      %s33 = scalar_select %p32, 0, %s31
      %s34 = ssub.s32 %s21, %s33
      %s35 = ssub.s32 %s22, %s29
      %s36 = sor.u32 %s34, %s35
      %p37 = scmp.eq.s32.totalorder %s36, 0
      %s39 = sadd.s32 %s38, 1
      %s40 = scalar_select %p37, %s38, %s39
      %p43 = pneg %p37
      %p44 = scmp.eq.s32.totalorder %s14, 3
      %p45 = por %p43, %p44
      %p46 = scmp.ne.s32.totalorder %s38, %s41
      %p47 = scmp.eq.s32.totalorder %s14, 0
      %p48 = por %p46, %p47
      %p49 = scmp.ne.s32.totalorder %s38, %s41
      %p50 = scmp.eq.s32.totalorder %s19, 3
      %p51 = por %p49, %p50
      %p52 = scmp.ne.s32.totalorder %s41, %s42
      %p53 = scmp.eq.s32.totalorder %s19, 0
      %p54 = por %p52, %p53
      %p55 = scmp.ne.s32.totalorder %s41, %s42
      %p56 = scmp.eq.s32.totalorder %s20, 3
      %p57 = por %p55, %p56
      %p59 = scmp.ne.s32.totalorder %s42, %s58
      %p60 = scmp.eq.s32.totalorder %s20, 0
      %p61 = por %p59, %p60
      %s63 = sadd.s32 %s62, 1
      %p66 = scmp.eq.s32.totalorder %s14, 3
      %p67 = scmp.ne.s32.totalorder %s62, %s64
      %p68 = scmp.eq.s32.totalorder %s14, 0
      %p69 = por %p67, %p68
      %p70 = scmp.ne.s32.totalorder %s62, %s64
      %p71 = scmp.eq.s32.totalorder %s19, 3
      %p72 = por %p70, %p71
      %p73 = scmp.ne.s32.totalorder %s64, %s65
      %p74 = scmp.eq.s32.totalorder %s19, 0
      %p75 = por %p73, %p74
      %p76 = scmp.ne.s32.totalorder %s64, %s65
      %p77 = scmp.eq.s32.totalorder %s20, 3
      %p78 = por %p76, %p77
      %p80 = scmp.ne.s32.totalorder %s65, %s79
      %p81 = scmp.eq.s32.totalorder %s20, 0
      %p82 = por %p80, %p81
      %s84 = sadd.s32 %s83, 1
      %p87 = scmp.eq.s32.totalorder %s14, 3
      %p88 = scmp.ne.s32.totalorder %s83, %s85
      %p89 = scmp.eq.s32.totalorder %s14, 0
      %p90 = por %p88, %p89
      %p91 = scmp.ne.s32.totalorder %s83, %s85
      %p92 = scmp.eq.s32.totalorder %s19, 3
      %p93 = por %p91, %p92
      %p94 = scmp.ne.s32.totalorder %s85, %s86
      %p95 = scmp.eq.s32.totalorder %s19, 0
      %p96 = por %p94, %p95
      %p97 = scmp.ne.s32.totalorder %s85, %s86
      %p98 = scmp.eq.s32.totalorder %s20, 3
      %p99 = por %p97, %p98
      %p101 = scmp.ne.s32.totalorder %s86, %s100
      %p102 = scmp.eq.s32.totalorder %s20, 0
      %p103 = por %p101, %p102
      %s104 = ssub.s32 %s21, %s33
      %p105 = scmp.eq.s32.totalorder %s104, 0
      %s107 = sadd.s32 %s106, 1
      %s108 = scalar_select %p105, %s106, %s107
      %p111 = pneg %p105
      %p112 = scmp.eq.s32.totalorder %s14, 3
      %p113 = por %p111, %p112
      %p114 = scmp.ne.s32.totalorder %s106, %s109
      %p115 = scmp.eq.s32.totalorder %s14, 0
      %p116 = por %p114, %p115
      %p117 = scmp.ne.s32.totalorder %s106, %s109
      %p118 = scmp.eq.s32.totalorder %s19, 3
      %p119 = por %p117, %p118
      %p120 = scmp.ne.s32.totalorder %s109, %s110
      %p121 = scmp.eq.s32.totalorder %s19, 0
      %p122 = por %p120, %p121
      %p123 = scmp.ne.s32.totalorder %s109, %s110
      %p124 = scmp.eq.s32.totalorder %s20, 3
      %p125 = por %p123, %p124
      %p127 = scmp.ne.s32.totalorder %s110, %s126
      %p128 = scmp.eq.s32.totalorder %s20, 0
      %p129 = por %p127, %p128
      %p130 = scmp.le.s32.totalorder 1, %s14
      %p131 = scmp.lt.s32.totalorder %s14, 5
      %p132 = pnand %p130, %p131
      %p133 = pneg %p132
      // Predicated region
      $region9: #{tpu_custom_call.1} parent=5 // pred_check
        _
      $region10: #{tpu_custom_call.1} parent=5 // pred_check_branch
        %135 = sbr.rel (%p132) target = $region12
      $region11: #{tpu_custom_call.1} parent=5 // pred_region
        %s136 = ssub.s32 %s14, 1
        // Predicated region
        $region13: #{tpu_custom_call.1} parent=11 // pred_check
          %p137 = pneg %p75
        $region14: #{tpu_custom_call.1} parent=11 // pred_check_branch
          %139 = sbr.rel (%p137) target = $region16
        $region15: #{tpu_custom_call.1} parent=11 // pred_region
          %141 = vsyncadd [#allocation7], 0
          %s142 = sshll.u32 %s1, 4
          %s143 = int_to_ptr.hbm [resolvable:$true] %s142
          %s144 = sshll.u32 [#allocation6], 4
          %s145 = int_to_ptr.vmem [resolvable:$true] %s144
          %150 = dma.hbm_to_vmem [thread:$0]  %s143, 1024, %s145, [#allocation7], 64, 64, 4
        $region16: #{tpu_custom_call.1} parent=11 // pred_fallthru
          _
        // Predicated region
        $region17: #{tpu_custom_call.1} parent=11 // pred_check
          %p151 = pneg %p96
        $region18: #{tpu_custom_call.1} parent=11 // pred_check_branch
          %153 = sbr.rel (%p151) target = $region20
        $region19: #{tpu_custom_call.1} parent=11 // pred_region
          _
        $region20: #{tpu_custom_call.1} parent=11 // pred_fallthru
          _
      $region12: #{tpu_custom_call.1} parent=5 // pred_fallthru
        _
      %p154 = scmp.lt.s32.totalorder %s14, 4
      // Predicated region
      $region21: #{tpu_custom_call.1} parent=5 // pred_check
        %p155 = pneg %p154
      $region22: #{tpu_custom_call.1} parent=5 // pred_check_branch
        %157 = sbr.rel (%p155) target = $region24
      $region23: #{tpu_custom_call.1} parent=5 // pred_region
        // Predicated region
        $region25: #{tpu_custom_call.1} parent=23 // pred_check
          %p158 = pneg %p48
        $region26: #{tpu_custom_call.1} parent=23 // pred_check_branch
          %160 = sbr.rel (%p158) target = $region28
        $region27: #{tpu_custom_call.1} parent=23 // pred_region
          #allocation10 [shape = 'u32[6]{0}', space=smem, size = 0x18, scoped, tag = 'DMA stride descriptor']
          %s161 = sand.u32 %s38, 1
          %s162 = scalar_lea.sflag [#allocation4], %s161
          %s163 = sand.u32 %s38, 1
          %s164 = smul.addr %s163, 64
          %s165 = scalar_lea.vmem [#allocation3], %s164
          %s166 = smul.u32 8, %s21
          %s167 = smul.u32 2, %s22
          %169 = vsyncadd %s162, 0
          %s170 = smul.addr %s166, 8
          %s171 = sadd.s32 %s167, %s170
          %s172 = smul.addr %s171, 4
          %s173 = scalar_lea.hbm %s0, %s172
          %s175 = sshll.u32 1, 14
          %s176 = sxor.u32 4294967295, %s175
          %s178 = sld [smem:[#allocation0]]
          %s179 = sadd.s32 2, %s178
          %s181 = sshll.u32 7, 26
          %s182 = sxor.u32 4294967295, %s181
          %s183 = sand.u32 0, %s182
          %s184 = sshll.u32 %s179, 26
          %s185 = sor.u32 %s183, %s184
          %s186 = sshll.u32 %s173, 4
          %s187 = int_to_ptr.hbm [resolvable:$true] %s186
          %s188 = sshll.u32 %s165, 4
          %s189 = int_to_ptr.vmem [resolvable:$true] %s188
          %195 = sst [smem:[#allocation10]] 512
          %s196 = scalar_lea.smem [#allocation10], 1
          %197 = sst [smem:[%s196]] 128
          %s198 = scalar_lea.smem [#allocation10], 2
          %199 = sst [smem:[%s198]] 2
          %s200 = scalar_lea.smem [#allocation10], 3
          %201 = sst [smem:[%s200]] 64
          %s202 = scalar_lea.smem [#allocation10], 4
          %203 = sst [smem:[%s202]] 64
          %s204 = scalar_lea.smem [#allocation10], 5
          %205 = sst [smem:[%s204]] 4
          %207 = dma.general %s187, 1024, %s189, %s162, [#allocation9], [#allocation10], %s185, 0
        $region28: #{tpu_custom_call.1} parent=23 // pred_fallthru
          _
      $region24: #{tpu_custom_call.1} parent=5 // pred_fallthru
        _
      %p208 = scmp.le.s32.totalorder 1, %s14
      %p209 = scmp.lt.s32.totalorder %s14, 5
      %p210 = pnand %p208, %p209
      %p211 = pneg %p210
      // Predicated region
      $region29: #{tpu_custom_call.1} parent=5 // pred_check
        _
      $region30: #{tpu_custom_call.1} parent=5 // pred_check_branch
        %213 = sbr.rel (%p210) target = $region32
      $region31: #{tpu_custom_call.1} parent=5 // pred_region
        %s214 = ssub.s32 %s14, 1
        %s215 = sand.u32 %s41, 1
        %s216 = scalar_lea.sflag [#allocation4], %s215
        %s217 = sand.u32 %s41, 1
        %s218 = smul.addr %s217, 64
        %s219 = scalar_lea.vmem [#allocation3], %s218
        // Predicated region
        $region33: #{tpu_custom_call.1} parent=31 // pred_check
          %p220 = pneg %p54
        $region34: #{tpu_custom_call.1} parent=31 // pred_check_branch
          %222 = sbr.rel (%p220) target = $region36
        $region35: #{tpu_custom_call.1} parent=31 // pred_region
          %224 = dma.done %s216, 1024
        $region36: #{tpu_custom_call.1} parent=31 // pred_fallthru
          _
        // Predicated region
        $region37: #{tpu_custom_call.1} parent=31 // pred_check
          %p225 = pneg %p75
        $region38: #{tpu_custom_call.1} parent=31 // pred_check_branch
          %227 = sbr.rel (%p225) target = $region40
        $region39: #{tpu_custom_call.1} parent=31 // pred_region
          %229 = dma.done [#allocation7], 1024
        $region40: #{tpu_custom_call.1} parent=31 // pred_fallthru
          _
        %s230 = sand.u32 %s41, 1
        %s231 = scalar_lea.sflag [#allocation4], %s230
        %s232 = sand.u32 %s41, 1
        %s233 = smul.addr %s232, 64
        %s234 = scalar_lea.vmem [#allocation3], %s233
        %p235 = pneg %p54
        %p236 = pneg %p51
        %p237 = pneg %p75
        %p238 = pneg %p72
        %p239 = pneg %p96
        %p240 = pneg %p93
        %p241 = pneg %p122
        %p242 = pneg %p119
        %s243 = smul.u32 8, %s23
        %s244 = smul.u32 2, %s24
        %p245 = scmp.eq.s32.totalorder %s24, 0
        // Predicated region
        $region41: #{tpu_custom_call.1} parent=31 // pred_check
          %p246 = pneg %p245
        $region42: #{tpu_custom_call.1} parent=31 // pred_check_branch
          %248 = sbr.rel (%p246) target = $region44
        $region43: #{tpu_custom_call.1} parent=31 // pred_region
          %249 = vst [vmem:[#allocation2] sm:$0xff] 0.0
        $region44: #{tpu_custom_call.1} parent=31 // pred_fallthru
          _
        %v250 = vld [vmem:[#allocation2] sm:$0xff]
        %v251 = vld [vmem:[%s219] sm:$0xf]
        %v252 = vld [vmem:[%s219 + $0x4] sm:$0xf]
        %v253 = vld [vmem:[%s219 + $0x8] sm:$0xf]
        %v254 = vld [vmem:[%s219 + $0xc] sm:$0xf]
        %v255 = vld [vmem:[%s219 + $0x10] sm:$0xf]
        %v256 = vld [vmem:[%s219 + $0x14] sm:$0xf]
        %v257 = vld [vmem:[%s219 + $0x18] sm:$0xf]
        %v258 = vld [vmem:[%s219 + $0x1c] sm:$0xf]
        %v259 = vld [vmem:[%s219 + $0x20] sm:$0xf]
        %v260 = vld [vmem:[%s219 + $0x24] sm:$0xf]
        %v261 = vld [vmem:[%s219 + $0x28] sm:$0xf]
        %v262 = vld [vmem:[%s219 + $0x2c] sm:$0xf]
        %v263 = vld [vmem:[%s219 + $0x30] sm:$0xf]
        %v264 = vld [vmem:[%s219 + $0x34] sm:$0xf]
        %v265 = vld [vmem:[%s219 + $0x38] sm:$0xf]
        %v266 = vld [vmem:[%s219 + $0x3c] sm:$0xf]
        %v267 = vunpack.c.l.bf16 %v251
        %v268 = vunpack.c.l.bf16 %v252
        %v269 = vunpack.c.l.bf16 %v253
        %v270 = vunpack.c.l.bf16 %v254
        %v271 = vunpack.c.l.bf16 %v255
        %v272 = vunpack.c.l.bf16 %v256
        %v273 = vunpack.c.l.bf16 %v257
        %v274 = vunpack.c.l.bf16 %v258
        %v275 = vunpack.c.l.bf16 %v259
        %v276 = vunpack.c.l.bf16 %v260
        %v277 = vunpack.c.l.bf16 %v261
        %v278 = vunpack.c.l.bf16 %v262
        %v279 = vunpack.c.l.bf16 %v263
        %v280 = vunpack.c.l.bf16 %v264
        %v281 = vunpack.c.l.bf16 %v265
        %v282 = vunpack.c.l.bf16 %v266
        %v283 = vadd.f32 %v267, %v268
        %v284 = vrot.slane %v283, 4
        %v285 = vadd.f32 %v283, %v284
        %v286 = vrot.slane %v285, 2
        %v287 = vadd.f32 %v285, %v286
        %v288 = vrot.slane %v287, 1
        %v289 = vadd.f32 %v287, %v288
        %v290 = vadd.f32 %v269, %v270
        %v291 = vrot.slane %v290, 4
        %v292 = vadd.f32 %v290, %v291
        %v293 = vrot.slane %v292, 2
        %v294 = vadd.f32 %v292, %v293
        %v295 = vrot.slane %v294, 1
        %v296 = vadd.f32 %v294, %v295
        %v297 = vadd.f32 %v271, %v272
        %v298 = vrot.slane %v297, 4
        %v299 = vadd.f32 %v297, %v298
        %v300 = vrot.slane %v299, 2
        %v301 = vadd.f32 %v299, %v300
        %v302 = vrot.slane %v301, 1
        %v303 = vadd.f32 %v301, %v302
        %v304 = vadd.f32 %v273, %v274
        %v305 = vrot.slane %v304, 4
        %v306 = vadd.f32 %v304, %v305
        %v307 = vrot.slane %v306, 2
        %v308 = vadd.f32 %v306, %v307
        %v309 = vrot.slane %v308, 1
        %v310 = vadd.f32 %v308, %v309
        %v311 = vadd.f32 %v275, %v276
        %v312 = vrot.slane %v311, 4
        %v313 = vadd.f32 %v311, %v312
        %v314 = vrot.slane %v313, 2
        %v315 = vadd.f32 %v313, %v314
        %v316 = vrot.slane %v315, 1
        %v317 = vadd.f32 %v315, %v316
        %v318 = vadd.f32 %v277, %v278
        %v319 = vrot.slane %v318, 4
        %v320 = vadd.f32 %v318, %v319
        %v321 = vrot.slane %v320, 2
        %v322 = vadd.f32 %v320, %v321
        %v323 = vrot.slane %v322, 1
        %v324 = vadd.f32 %v322, %v323
        %v325 = vadd.f32 %v279, %v280
        %v326 = vrot.slane %v325, 4
        %v327 = vadd.f32 %v325, %v326
        %v328 = vrot.slane %v327, 2
        %v329 = vadd.f32 %v327, %v328
        %v330 = vrot.slane %v329, 1
        %v331 = vadd.f32 %v329, %v330
        %v332 = vadd.f32 %v281, %v282
        %v333 = vrot.slane %v332, 4
        %v334 = vadd.f32 %v332, %v333
        %v335 = vrot.slane %v334, 2
        %v336 = vadd.f32 %v334, %v335
        %v337 = vrot.slane %v336, 1
        %v338 = vadd.f32 %v336, %v337
        %vm347 = vcmask 1041409
        %v348 = vsel %vm347, %v296, %v289
        %vm349 = vcmask 1042434
        %v350 = vsel %vm349, %v303, %v348
        %vm351 = vcmask 1043459
        %v352 = vsel %vm351, %v310, %v350
        %vm353 = vcmask 1044484
        %v354 = vsel %vm353, %v317, %v352
        %vm355 = vcmask 1045509
        %v356 = vsel %vm355, %v324, %v354
        %vm357 = vcmask 1046534
        %v358 = vsel %vm357, %v331, %v356
        %vm359 = vcmask 1047559
        %v360 = vsel %vm359, %v338, %v358
        %v362 = vadd.f32 %v250, %v360
        %363 = vst [vmem:[#allocation2] sm:$0xff] %v362
        %p364 = scmp.eq.s32.totalorder %s24, 3
        // Predicated region
        $region45: #{tpu_custom_call.1} parent=31 // pred_check
          %p365 = pneg %p364
        $region46: #{tpu_custom_call.1} parent=31 // pred_check_branch
          %367 = sbr.rel (%p365) target = $region48
        $region47: #{tpu_custom_call.1} parent=31 // pred_region
          %v368 = vld [vmem:[#allocation2] sm:$0xff]
          %v369 = vmul.f32 %v368, 0.015625
          %v370 = vld [vmem:[#allocation6] sm:$0xf]
          %v371 = vld [vmem:[#allocation6 + $0x4] sm:$0xf]
          %v372 = vld [vmem:[#allocation6 + $0x8] sm:$0xf]
          %v373 = vld [vmem:[#allocation6 + $0xc] sm:$0xf]
          %v374 = vld [vmem:[#allocation6 + $0x10] sm:$0xf]
          %v375 = vld [vmem:[#allocation6 + $0x14] sm:$0xf]
          %v376 = vld [vmem:[#allocation6 + $0x18] sm:$0xf]
          %v377 = vld [vmem:[#allocation6 + $0x1c] sm:$0xf]
          %v378 = vld [vmem:[#allocation6 + $0x20] sm:$0xf]
          %v379 = vld [vmem:[#allocation6 + $0x24] sm:$0xf]
          %v380 = vld [vmem:[#allocation6 + $0x28] sm:$0xf]
          %v381 = vld [vmem:[#allocation6 + $0x2c] sm:$0xf]
          %v382 = vld [vmem:[#allocation6 + $0x30] sm:$0xf]
          %v383 = vld [vmem:[#allocation6 + $0x34] sm:$0xf]
          %v384 = vld [vmem:[#allocation6 + $0x38] sm:$0xf]
          %v385 = vld [vmem:[#allocation6 + $0x3c] sm:$0xf]
          %v386 = vunpack.c.l.bf16 %v370
          %v387 = vunpack.c.l.bf16 %v371
          %v388 = vunpack.c.l.bf16 %v372
          %v389 = vunpack.c.l.bf16 %v373
          %v390 = vunpack.c.l.bf16 %v374
          %v391 = vunpack.c.l.bf16 %v375
          %v392 = vunpack.c.l.bf16 %v376
          %v393 = vunpack.c.l.bf16 %v377
          %v394 = vunpack.c.l.bf16 %v378
          %v395 = vunpack.c.l.bf16 %v379
          %v396 = vunpack.c.l.bf16 %v380
          %v397 = vunpack.c.l.bf16 %v381
          %v398 = vunpack.c.l.bf16 %v382
          %v399 = vunpack.c.l.bf16 %v383
          %v400 = vunpack.c.l.bf16 %v384
          %v401 = vunpack.c.l.bf16 %v385
          %v402 = vld [vmem:[%s2] sm:$0x1]
          %v404 = vperm.slane %v402, 0
          %406 = vmatpush.msra.mxu0 %v401
          %407 = vmatpush.msra.mxu0 %v400
          %408 = vmatpush.msra.mxu0 %v399
          %409 = vmatpush.msra.mxu0 %v398
          %410 = vmatpush.msra.mxu0 %v397
          %411 = vmatpush.msra.mxu0 %v396
          %412 = vmatpush.msra.mxu0 %v395
          %413 = vmatpush.msra.mxu0 %v394
          %414 = vmatpush.msra.mxu0 %v393
          %415 = vmatpush.msra.mxu0 %v392
          %416 = vmatpush.msra.mxu0 %v391
          %417 = vmatpush.msra.mxu0 %v390
          %418 = vmatpush.msra.mxu0 %v389
          %419 = vmatpush.msra.mxu0 %v388
          %420 = vmatpush.msra.mxu0 %v387
          %421 = vmatpush.msra.mxu0 %v386
          %422 = vmatmul.f32.gmra.mxu0 %v369
          %v423 = vpop.f32.mrf.mxu0
          %v424 = vadd.f32 %v404, %v423
          %425 = vdwg.mxu0
          %426 = vst [vmem:[#allocation8] sm:$0xff] %v424
        $region48: #{tpu_custom_call.1} parent=31 // pred_fallthru
          _
        // Predicated region
        $region49: #{tpu_custom_call.1} parent=31 // pred_check
          %p427 = pneg %p119
        $region50: #{tpu_custom_call.1} parent=31 // pred_check_branch
          %429 = sbr.rel (%p427) target = $region52
        $region51: #{tpu_custom_call.1} parent=31 // pred_region
          %431 = vsyncadd [#allocation5], 0
          %s432 = smul.addr %s23, 8
          %s433 = scalar_lea.hbm %s3, %s432
          %s435 = sshll.u32 [#allocation8], 4
          %s436 = int_to_ptr.vmem [resolvable:$true] %s435
          %s437 = sshll.u32 %s433, 4
          %s438 = int_to_ptr.hbm [resolvable:$true] %s437
          %440 = dma.vmem_to_hbm [thread:$0]  %s436, 128, %s438, [#allocation5]
        $region52: #{tpu_custom_call.1} parent=31 // pred_fallthru
          _
        // Predicated region
        $region53: #{tpu_custom_call.1} parent=31 // pred_check
          %p441 = pneg %p119
        $region54: #{tpu_custom_call.1} parent=31 // pred_check_branch
          %443 = sbr.rel (%p441) target = $region56
        $region55: #{tpu_custom_call.1} parent=31 // pred_region
          %445 = dma.done [#allocation5], 128
        $region56: #{tpu_custom_call.1} parent=31 // pred_fallthru
          _
      $region32: #{tpu_custom_call.1} parent=5 // pred_fallthru
        _
      %p446 = scmp.le.s32.totalorder 2, %s14
      // Predicated region
      $region57: #{tpu_custom_call.1} parent=5 // pred_check
        %p447 = pneg %p446
      $region58: #{tpu_custom_call.1} parent=5 // pred_check_branch
        %449 = sbr.rel (%p447) target = $region60
      $region59: #{tpu_custom_call.1} parent=5 // pred_region
        %s450 = ssub.s32 %s14, 2
      $region60: #{tpu_custom_call.1} parent=5 // pred_fallthru
        _
    $region6: #{tpu_custom_call.1} parent=1 // loop_footer
      %s18 = sadd.s32 1, %s14
    $region7: #{tpu_custom_call.1} parent=1 // loop_footer_branch
      %13 = sbr.rel target = $region3
    $region8: #{tpu_custom_call.1} parent=1 // loop_exit
      _
    %451 = vsyncpa [#allocation4], 1
    %s452 = scalar_lea.sflag [#allocation4], 1
    %453 = vsyncpa %s452, 1
    %454 = vsyncpa [#allocation7], 1
    %455 = vsyncpa [#allocation5], 1
    %s456 = scalar_lea.sflag [#allocation5], 1
    %457 = vsyncpa %s456, 1

</llo_original>
